<compile_context>
chip_gen: v5e
topology: v5e:2x2
jax: 0.10.0
libtpu: 0.0.40
codegen_flags: <defaults>
</compile_context>

<pallas_src>
import jax
import jax.numpy as jnp
from jax.experimental import pallas as pl
from jax.experimental.pallas import tpu as pltpu


def _round_up(v, m):
    return (v + m - 1) // m * m


def _vmem_capacity_bytes():
    """Generation-aware VMEM capacity (128 MiB v5e/v6e, 64 MiB per-core v7x)."""
    try:
        info = pltpu.get_tpu_info()
        cap = getattr(info, "vmem_capacity_bytes", None)
        if cap:
            return int(cap)
    except Exception:
        pass
    return 64 * 1024 * 1024  # conservative fallback (v7x per-TensorCore)


def _make_kernel(kh, kw, w_stride, c_pad, m_lane):
    """Fused-im2col conv kernel; all sizes static, tap loop unrolled."""

    def kernel(x_ref, w_ref, o_ref, slab_ref):
        # x_ref   : (c_pad, hwp)     one image, NCHW-native: lane index = h*W + w
        # w_ref   : (o_sub, K)       K = kh*kw*c_pad, whole array resident in VMEM
        # o_ref   : (o_sub, m_lane)  output rows on the lane axis (lane-dense store)
        # slab_ref: (K, m_lane)      fused-im2col slab (VMEM scratch, rebuilt/step)
        for i in range(kh):
            for j in range(kw):
                t = i * kw + j
                off = i * w_stride + j
                # sublane-aligned write (row offset t*c_pad), static lane-shift read
                slab_ref[t * c_pad:(t + 1) * c_pad, :] = x_ref[:, off:off + m_lane]
        # Single big-K matmul; f32 MXU accumulation; one store, no scratch RMW.
        o_ref[...] = jnp.dot(
            w_ref[...], slab_ref[...], preferred_element_type=jnp.float32
        ).astype(o_ref.dtype)

    return kernel


def hebbian_conv2d_forward(x, weight, *, compute_dtype=None):
    """Equivalent of HebbianConv2d.forward in eval mode:
    conv2d(x, weight), stride 1, VALID padding, NCHW input / OIHW weight.

    compute_dtype: optional operand dtype for the MXU (e.g. jnp.bfloat16 on
    v6e/v7x; expect >1e-4 deviation from an f32 reference for large C*kh*kw)."""
    O, C, kh, kw = weight.shape
    N, Cx, H, W = x.shape
    assert Cx == C, (Cx, C)
    Ho, Wo = H - kh + 1, W - kw + 1

    in_dtype = jnp.dtype(x.dtype if compute_dtype is None else compute_dtype)
    out_dtype = jnp.dtype(x.dtype)
    item = in_dtype.itemsize
    oitem = out_dtype.itemsize

    # ---- padded / aligned sizes --------------------------------------------
    sub_tile = 8 * max(1, 4 // item)              # native sublane tile (8/16/32)
    c_pad = _round_up(C, sub_tile)                # per-tap channel rows in the slab
    o_sub = _round_up(O, 8)                       # output channels on sublanes
    K = kh * kw * c_pad                           # folded contraction depth
    m_lane = _round_up(Ho * W, 128)               # lane-dense output rows per image
    off_max = (kh - 1) * W + (kw - 1)             # largest shifted-read offset
    hwp = _round_up(off_max + m_lane, 128)        # padded flattened-spatial width

    # ---- operand prep --------------------------------------------------------
    # x: NCHW -> (N, C, H*W) is a free view; pad channels (sublanes) and the
    # flattened spatial lane axis so every shifted read stays in bounds.
    # (Single pad pass over x; no im2col and no layout transpose in HBM.)
    xp = jnp.pad(x.reshape(N, C, H * W),
                 ((0, 0), (0, c_pad - C), (0, hwp - H * W))).astype(in_dtype)

    # w2[o, (i*kw+j)*c_pad + c] = weight[o, c, i, j]   (matches slab row order)
    w2 = jnp.transpose(weight, (0, 2, 3, 1)).reshape(O, kh * kw, C)
    w2 = jnp.pad(w2, ((0, o_sub - O), (0, 0), (0, c_pad - C)))
    w2 = w2.reshape(o_sub, K).astype(in_dtype)

    kernel = _make_kernel(kh, kw, W, c_pad, m_lane)

    cost = pl.CostEstimate(
        flops=2 * N * o_sub * K * m_lane,
        transcendentals=0,
        bytes_accessed=xp.size * item + w2.size * item + N * o_sub * m_lane * oitem,
    )

    # VMEM budget from the actual block footprint, capped by device capacity.
    x_blk = c_pad * hwp * item
    out_blk = o_sub * m_lane * oitem
    need = 2 * x_blk + 2 * out_blk + o_sub * K * item + K * m_lane * item + (4 << 20)
    vmem_limit = min(max(need, 32 << 20), int(0.85 * _vmem_capacity_bytes()))

    out = pl.pallas_call(
        kernel,
        out_shape=jax.ShapeDtypeStruct((N, o_sub, m_lane), out_dtype),
        grid_spec=pltpu.PrefetchScalarGridSpec(
            num_scalar_prefetch=0,
            grid=(N,),                                             # one image / step
            in_specs=[
                pl.BlockSpec((None, c_pad, hwp), lambda n: (n, 0, 0)),
                # constant weight: whole array resident in VMEM once,
                # not double-buffered through the pipeline.
                pl.BlockSpec(memory_space=pltpu.MemorySpace.VMEM),
            ],
            out_specs=pl.BlockSpec((None, o_sub, m_lane), lambda n: (n, 0, 0)),
            scratch_shapes=[pltpu.VMEM((K, m_lane), in_dtype)],    # im2col slab
        ),
        compiler_params=pltpu.CompilerParams(
            dimension_semantics=("parallel",),
            vmem_limit_bytes=vmem_limit,
        ),
        cost_estimate=cost,
    )(xp, w2)

    # (N, o_sub, m_lane) is already channel-major: slice valid rows/cols -> NCHW.
    y = out[:, :O, :Ho * W].reshape(N, O, Ho, W)[:, :, :, :Wo]
    return y.astype(x.dtype)


def init_hebbian_conv2d_weight(key, in_channels, out_size, kernel_size):
    """Matches HebbianConv2d.__init__ weight init (INIT_BASE):
    uniform(-stdv, stdv), stdv = 1/sqrt(C*kH*kW)."""
    out_size_list = [out_size] if not hasattr(out_size, "__len__") else list(out_size)
    out_channels = 1
    for s in out_size_list[: min(len(out_size_list), 3)]:
        out_channels *= int(s)
    if not hasattr(kernel_size, "__len__"):
        kernel_size = [kernel_size, kernel_size]
    kh, kw = int(kernel_size[0]), int(kernel_size[1])
    stdv = 1.0 / (in_channels * kh * kw) ** 0.5
    w = jax.random.uniform(
        key, (out_channels, in_channels, kh, kw),
        minval=-stdv, maxval=stdv, dtype=jnp.float32,
    )
    return w


if __name__ == "__main__":
    key = jax.random.PRNGKey(0)
    k_w, k_x = jax.random.split(key)

    # Small shapes consistent with the module: N=2, C=4, 16x16 input,
    # out_size=8 (-> 8 output channels), 5x5 kernel.
    in_channels, out_size, kernel_size = 4, 8, 5
    x = jax.random.normal(k_x, (2, in_channels, 16, 16), dtype=jnp.float32)
    weight = init_hebbian_conv2d_weight(k_w, in_channels, out_size, kernel_size)

    y = hebbian_conv2d_forward(x, weight)
    y = jax.block_until_ready(y)

    # Reference: plain XLA conv (NCHW / OIHW), stride 1, VALID padding.
    y_ref = jax.lax.conv_general_dilated(
        x, weight, window_strides=(1, 1), padding="VALID",
        dimension_numbers=("NCHW", "OIHW", "NCHW"),
    )
    assert y.shape == y_ref.shape == (2, 8, 12, 12), y.shape
    assert jnp.allclose(y, y_ref, atol=1e-4, rtol=1e-4), \
        float(jnp.max(jnp.abs(y - y_ref)))

    print("KERNEL_OK")
</pallas_src>

<mosaic_0001>
module attributes {stable_mosaic.version = 11 : i64} {
  func.func @kernel(%arg0: i32, %arg1: memref<1x8x384xf32, #tpu.memory_space<vmem>>, %arg2: memref<8x200xf32, #tpu.memory_space<vmem>>, %arg3: memref<1x8x256xf32, #tpu.memory_space<vmem>>, %arg4: memref<200x256xf32, #tpu.memory_space<vmem>>) attributes {dimension_semantics = [#tpu.dimension_semantics<parallel>], iteration_bounds = array<i64: 2>, scalar_prefetch = 0 : i64, scratch_operands = 1 : i64, tpu.core_type = #tpu.core_type<tc>, window_params = [{transform_indices = @transform_0, window_bounds = array<i64: 1, 8, 384>}, {pipeline_mode = #tpu.pipeline_mode<synchronous>, transform_indices = @transform_1, window_bounds = array<i64: 8, 200>}, {transform_indices = @transform_2, window_bounds = array<i64: 1, 8, 256>}]} {
    %c0 = arith.constant 0 : index
    %c0_0 = arith.constant 0 : index
    %c0_1 = arith.constant 0 : index
    %0 = vector.load %arg1[%c0, %c0_0, %c0_1] : memref<1x8x384xf32, #tpu.memory_space<vmem>>, vector<1x8x256xf32>
    %1 = vector.shape_cast %0 : vector<1x8x256xf32> to vector<8x256xf32>
    %c0_2 = arith.constant 0 : index
    %c0_3 = arith.constant 0 : index
    %2 = vector.load %arg4[%c0_2, %c0_3] : memref<200x256xf32, #tpu.memory_space<vmem>>, vector<8x256xf32>
    tpu.vector_store %arg4[%c0_2, %c0_3], %1 {strides = array<i32>} : memref<200x256xf32, #tpu.memory_space<vmem>>, vector<8x256xf32>,
    %c0_4 = arith.constant 0 : index
    %c0_5 = arith.constant 0 : index
    %c1 = arith.constant 1 : index
    %3 = vector.load %arg1[%c0_4, %c0_5, %c1] : memref<1x8x384xf32, #tpu.memory_space<vmem>>, vector<1x8x256xf32>
    %4 = vector.shape_cast %3 : vector<1x8x256xf32> to vector<8x256xf32>
    %c8 = arith.constant 8 : index
    %c0_6 = arith.constant 0 : index
    %5 = vector.load %arg4[%c8, %c0_6] : memref<200x256xf32, #tpu.memory_space<vmem>>, vector<8x256xf32>
    tpu.vector_store %arg4[%c8, %c0_6], %4 {strides = array<i32>} : memref<200x256xf32, #tpu.memory_space<vmem>>, vector<8x256xf32>,
    %c0_7 = arith.constant 0 : index
    %c0_8 = arith.constant 0 : index
    %c2 = arith.constant 2 : index
    %6 = vector.load %arg1[%c0_7, %c0_8, %c2] : memref<1x8x384xf32, #tpu.memory_space<vmem>>, vector<1x8x256xf32>
    %7 = vector.shape_cast %6 : vector<1x8x256xf32> to vector<8x256xf32>
    %c16 = arith.constant 16 : index
    %c0_9 = arith.constant 0 : index
    %8 = vector.load %arg4[%c16, %c0_9] : memref<200x256xf32, #tpu.memory_space<vmem>>, vector<8x256xf32>
    tpu.vector_store %arg4[%c16, %c0_9], %7 {strides = array<i32>} : memref<200x256xf32, #tpu.memory_space<vmem>>, vector<8x256xf32>,
    %c0_10 = arith.constant 0 : index
    %c0_11 = arith.constant 0 : index
    %c3 = arith.constant 3 : index
    %9 = vector.load %arg1[%c0_10, %c0_11, %c3] : memref<1x8x384xf32, #tpu.memory_space<vmem>>, vector<1x8x256xf32>
    %10 = vector.shape_cast %9 : vector<1x8x256xf32> to vector<8x256xf32>
    %c24 = arith.constant 24 : index
    %c0_12 = arith.constant 0 : index
    %11 = vector.load %arg4[%c24, %c0_12] : memref<200x256xf32, #tpu.memory_space<vmem>>, vector<8x256xf32>
    tpu.vector_store %arg4[%c24, %c0_12], %10 {strides = array<i32>} : memref<200x256xf32, #tpu.memory_space<vmem>>, vector<8x256xf32>,
    %c0_13 = arith.constant 0 : index
    %c0_14 = arith.constant 0 : index
    %c4 = arith.constant 4 : index
    %12 = vector.load %arg1[%c0_13, %c0_14, %c4] : memref<1x8x384xf32, #tpu.memory_space<vmem>>, vector<1x8x256xf32>
    %13 = vector.shape_cast %12 : vector<1x8x256xf32> to vector<8x256xf32>
    %c32 = arith.constant 32 : index
    %c0_15 = arith.constant 0 : index
    %14 = vector.load %arg4[%c32, %c0_15] : memref<200x256xf32, #tpu.memory_space<vmem>>, vector<8x256xf32>
    tpu.vector_store %arg4[%c32, %c0_15], %13 {strides = array<i32>} : memref<200x256xf32, #tpu.memory_space<vmem>>, vector<8x256xf32>,
    %c0_16 = arith.constant 0 : index
    %c0_17 = arith.constant 0 : index
    %c16_18 = arith.constant 16 : index
    %15 = vector.load %arg1[%c0_16, %c0_17, %c16_18] : memref<1x8x384xf32, #tpu.memory_space<vmem>>, vector<1x8x256xf32>
    %16 = vector.shape_cast %15 : vector<1x8x256xf32> to vector<8x256xf32>
    %c40 = arith.constant 40 : index
    %c0_19 = arith.constant 0 : index
    %17 = vector.load %arg4[%c40, %c0_19] : memref<200x256xf32, #tpu.memory_space<vmem>>, vector<8x256xf32>
    tpu.vector_store %arg4[%c40, %c0_19], %16 {strides = array<i32>} : memref<200x256xf32, #tpu.memory_space<vmem>>, vector<8x256xf32>,
    %c0_20 = arith.constant 0 : index
    %c0_21 = arith.constant 0 : index
    %c17 = arith.constant 17 : index
    %18 = vector.load %arg1[%c0_20, %c0_21, %c17] : memref<1x8x384xf32, #tpu.memory_space<vmem>>, vector<1x8x256xf32>
    %19 = vector.shape_cast %18 : vector<1x8x256xf32> to vector<8x256xf32>
    %c48 = arith.constant 48 : index
    %c0_22 = arith.constant 0 : index
    %20 = vector.load %arg4[%c48, %c0_22] : memref<200x256xf32, #tpu.memory_space<vmem>>, vector<8x256xf32>
    tpu.vector_store %arg4[%c48, %c0_22], %19 {strides = array<i32>} : memref<200x256xf32, #tpu.memory_space<vmem>>, vector<8x256xf32>,
    %c0_23 = arith.constant 0 : index
    %c0_24 = arith.constant 0 : index
    %c18 = arith.constant 18 : index
    %21 = vector.load %arg1[%c0_23, %c0_24, %c18] : memref<1x8x384xf32, #tpu.memory_space<vmem>>, vector<1x8x256xf32>
    %22 = vector.shape_cast %21 : vector<1x8x256xf32> to vector<8x256xf32>
    %c56 = arith.constant 56 : index
    %c0_25 = arith.constant 0 : index
    %23 = vector.load %arg4[%c56, %c0_25] : memref<200x256xf32, #tpu.memory_space<vmem>>, vector<8x256xf32>
    tpu.vector_store %arg4[%c56, %c0_25], %22 {strides = array<i32>} : memref<200x256xf32, #tpu.memory_space<vmem>>, vector<8x256xf32>,
    %c0_26 = arith.constant 0 : index
    %c0_27 = arith.constant 0 : index
    %c19 = arith.constant 19 : index
    %24 = vector.load %arg1[%c0_26, %c0_27, %c19] : memref<1x8x384xf32, #tpu.memory_space<vmem>>, vector<1x8x256xf32>
    %25 = vector.shape_cast %24 : vector<1x8x256xf32> to vector<8x256xf32>
    %c64 = arith.constant 64 : index
    %c0_28 = arith.constant 0 : index
    %26 = vector.load %arg4[%c64, %c0_28] : memref<200x256xf32, #tpu.memory_space<vmem>>, vector<8x256xf32>
    tpu.vector_store %arg4[%c64, %c0_28], %25 {strides = array<i32>} : memref<200x256xf32, #tpu.memory_space<vmem>>, vector<8x256xf32>,
    %c0_29 = arith.constant 0 : index
    %c0_30 = arith.constant 0 : index
    %c20 = arith.constant 20 : index
    %27 = vector.load %arg1[%c0_29, %c0_30, %c20] : memref<1x8x384xf32, #tpu.memory_space<vmem>>, vector<1x8x256xf32>
    %28 = vector.shape_cast %27 : vector<1x8x256xf32> to vector<8x256xf32>
    %c72 = arith.constant 72 : index
    %c0_31 = arith.constant 0 : index
    %29 = vector.load %arg4[%c72, %c0_31] : memref<200x256xf32, #tpu.memory_space<vmem>>, vector<8x256xf32>
    tpu.vector_store %arg4[%c72, %c0_31], %28 {strides = array<i32>} : memref<200x256xf32, #tpu.memory_space<vmem>>, vector<8x256xf32>,
    %c0_32 = arith.constant 0 : index
    %c0_33 = arith.constant 0 : index
    %c32_34 = arith.constant 32 : index
    %30 = vector.load %arg1[%c0_32, %c0_33, %c32_34] : memref<1x8x384xf32, #tpu.memory_space<vmem>>, vector<1x8x256xf32>
    %31 = vector.shape_cast %30 : vector<1x8x256xf32> to vector<8x256xf32>
    %c80 = arith.constant 80 : index
    %c0_35 = arith.constant 0 : index
    %32 = vector.load %arg4[%c80, %c0_35] : memref<200x256xf32, #tpu.memory_space<vmem>>, vector<8x256xf32>
    tpu.vector_store %arg4[%c80, %c0_35], %31 {strides = array<i32>} : memref<200x256xf32, #tpu.memory_space<vmem>>, vector<8x256xf32>,
    %c0_36 = arith.constant 0 : index
    %c0_37 = arith.constant 0 : index
    %c33 = arith.constant 33 : index
    %33 = vector.load %arg1[%c0_36, %c0_37, %c33] : memref<1x8x384xf32, #tpu.memory_space<vmem>>, vector<1x8x256xf32>
    %34 = vector.shape_cast %33 : vector<1x8x256xf32> to vector<8x256xf32>
    %c88 = arith.constant 88 : index
    %c0_38 = arith.constant 0 : index
    %35 = vector.load %arg4[%c88, %c0_38] : memref<200x256xf32, #tpu.memory_space<vmem>>, vector<8x256xf32>
    tpu.vector_store %arg4[%c88, %c0_38], %34 {strides = array<i32>} : memref<200x256xf32, #tpu.memory_space<vmem>>, vector<8x256xf32>,
    %c0_39 = arith.constant 0 : index
    %c0_40 = arith.constant 0 : index
    %c34 = arith.constant 34 : index
    %36 = vector.load %arg1[%c0_39, %c0_40, %c34] : memref<1x8x384xf32, #tpu.memory_space<vmem>>, vector<1x8x256xf32>
    %37 = vector.shape_cast %36 : vector<1x8x256xf32> to vector<8x256xf32>
    %c96 = arith.constant 96 : index
    %c0_41 = arith.constant 0 : index
    %38 = vector.load %arg4[%c96, %c0_41] : memref<200x256xf32, #tpu.memory_space<vmem>>, vector<8x256xf32>
    tpu.vector_store %arg4[%c96, %c0_41], %37 {strides = array<i32>} : memref<200x256xf32, #tpu.memory_space<vmem>>, vector<8x256xf32>,
    %c0_42 = arith.constant 0 : index
    %c0_43 = arith.constant 0 : index
    %c35 = arith.constant 35 : index
    %39 = vector.load %arg1[%c0_42, %c0_43, %c35] : memref<1x8x384xf32, #tpu.memory_space<vmem>>, vector<1x8x256xf32>
    %40 = vector.shape_cast %39 : vector<1x8x256xf32> to vector<8x256xf32>
    %c104 = arith.constant 104 : index
    %c0_44 = arith.constant 0 : index
    %41 = vector.load %arg4[%c104, %c0_44] : memref<200x256xf32, #tpu.memory_space<vmem>>, vector<8x256xf32>
    tpu.vector_store %arg4[%c104, %c0_44], %40 {strides = array<i32>} : memref<200x256xf32, #tpu.memory_space<vmem>>, vector<8x256xf32>,
    %c0_45 = arith.constant 0 : index
    %c0_46 = arith.constant 0 : index
    %c36 = arith.constant 36 : index
    %42 = vector.load %arg1[%c0_45, %c0_46, %c36] : memref<1x8x384xf32, #tpu.memory_space<vmem>>, vector<1x8x256xf32>
    %43 = vector.shape_cast %42 : vector<1x8x256xf32> to vector<8x256xf32>
    %c112 = arith.constant 112 : index
    %c0_47 = arith.constant 0 : index
    %44 = vector.load %arg4[%c112, %c0_47] : memref<200x256xf32, #tpu.memory_space<vmem>>, vector<8x256xf32>
    tpu.vector_store %arg4[%c112, %c0_47], %43 {strides = array<i32>} : memref<200x256xf32, #tpu.memory_space<vmem>>, vector<8x256xf32>,
    %c0_48 = arith.constant 0 : index
    %c0_49 = arith.constant 0 : index
    %c48_50 = arith.constant 48 : index
    %45 = vector.load %arg1[%c0_48, %c0_49, %c48_50] : memref<1x8x384xf32, #tpu.memory_space<vmem>>, vector<1x8x256xf32>
    %46 = vector.shape_cast %45 : vector<1x8x256xf32> to vector<8x256xf32>
    %c120 = arith.constant 120 : index
    %c0_51 = arith.constant 0 : index
    %47 = vector.load %arg4[%c120, %c0_51] : memref<200x256xf32, #tpu.memory_space<vmem>>, vector<8x256xf32>
    tpu.vector_store %arg4[%c120, %c0_51], %46 {strides = array<i32>} : memref<200x256xf32, #tpu.memory_space<vmem>>, vector<8x256xf32>,
    %c0_52 = arith.constant 0 : index
    %c0_53 = arith.constant 0 : index
    %c49 = arith.constant 49 : index
    %48 = vector.load %arg1[%c0_52, %c0_53, %c49] : memref<1x8x384xf32, #tpu.memory_space<vmem>>, vector<1x8x256xf32>
    %49 = vector.shape_cast %48 : vector<1x8x256xf32> to vector<8x256xf32>
    %c128 = arith.constant 128 : index
    %c0_54 = arith.constant 0 : index
    %50 = vector.load %arg4[%c128, %c0_54] : memref<200x256xf32, #tpu.memory_space<vmem>>, vector<8x256xf32>
    tpu.vector_store %arg4[%c128, %c0_54], %49 {strides = array<i32>} : memref<200x256xf32, #tpu.memory_space<vmem>>, vector<8x256xf32>,
    %c0_55 = arith.constant 0 : index
    %c0_56 = arith.constant 0 : index
    %c50 = arith.constant 50 : index
    %51 = vector.load %arg1[%c0_55, %c0_56, %c50] : memref<1x8x384xf32, #tpu.memory_space<vmem>>, vector<1x8x256xf32>
    %52 = vector.shape_cast %51 : vector<1x8x256xf32> to vector<8x256xf32>
    %c136 = arith.constant 136 : index
    %c0_57 = arith.constant 0 : index
    %53 = vector.load %arg4[%c136, %c0_57] : memref<200x256xf32, #tpu.memory_space<vmem>>, vector<8x256xf32>
    tpu.vector_store %arg4[%c136, %c0_57], %52 {strides = array<i32>} : memref<200x256xf32, #tpu.memory_space<vmem>>, vector<8x256xf32>,
    %c0_58 = arith.constant 0 : index
    %c0_59 = arith.constant 0 : index
    %c51 = arith.constant 51 : index
    %54 = vector.load %arg1[%c0_58, %c0_59, %c51] : memref<1x8x384xf32, #tpu.memory_space<vmem>>, vector<1x8x256xf32>
    %55 = vector.shape_cast %54 : vector<1x8x256xf32> to vector<8x256xf32>
    %c144 = arith.constant 144 : index
    %c0_60 = arith.constant 0 : index
    %56 = vector.load %arg4[%c144, %c0_60] : memref<200x256xf32, #tpu.memory_space<vmem>>, vector<8x256xf32>
    tpu.vector_store %arg4[%c144, %c0_60], %55 {strides = array<i32>} : memref<200x256xf32, #tpu.memory_space<vmem>>, vector<8x256xf32>,
    %c0_61 = arith.constant 0 : index
    %c0_62 = arith.constant 0 : index
    %c52 = arith.constant 52 : index
    %57 = vector.load %arg1[%c0_61, %c0_62, %c52] : memref<1x8x384xf32, #tpu.memory_space<vmem>>, vector<1x8x256xf32>
    %58 = vector.shape_cast %57 : vector<1x8x256xf32> to vector<8x256xf32>
    %c152 = arith.constant 152 : index
    %c0_63 = arith.constant 0 : index
    %59 = vector.load %arg4[%c152, %c0_63] : memref<200x256xf32, #tpu.memory_space<vmem>>, vector<8x256xf32>
    tpu.vector_store %arg4[%c152, %c0_63], %58 {strides = array<i32>} : memref<200x256xf32, #tpu.memory_space<vmem>>, vector<8x256xf32>,
    %c0_64 = arith.constant 0 : index
    %c0_65 = arith.constant 0 : index
    %c64_66 = arith.constant 64 : index
    %60 = vector.load %arg1[%c0_64, %c0_65, %c64_66] : memref<1x8x384xf32, #tpu.memory_space<vmem>>, vector<1x8x256xf32>
    %61 = vector.shape_cast %60 : vector<1x8x256xf32> to vector<8x256xf32>
    %c160 = arith.constant 160 : index
    %c0_67 = arith.constant 0 : index
    %62 = vector.load %arg4[%c160, %c0_67] : memref<200x256xf32, #tpu.memory_space<vmem>>, vector<8x256xf32>
    tpu.vector_store %arg4[%c160, %c0_67], %61 {strides = array<i32>} : memref<200x256xf32, #tpu.memory_space<vmem>>, vector<8x256xf32>,
    %c0_68 = arith.constant 0 : index
    %c0_69 = arith.constant 0 : index
    %c65 = arith.constant 65 : index
    %63 = vector.load %arg1[%c0_68, %c0_69, %c65] : memref<1x8x384xf32, #tpu.memory_space<vmem>>, vector<1x8x256xf32>
    %64 = vector.shape_cast %63 : vector<1x8x256xf32> to vector<8x256xf32>
    %c168 = arith.constant 168 : index
    %c0_70 = arith.constant 0 : index
    %65 = vector.load %arg4[%c168, %c0_70] : memref<200x256xf32, #tpu.memory_space<vmem>>, vector<8x256xf32>
    tpu.vector_store %arg4[%c168, %c0_70], %64 {strides = array<i32>} : memref<200x256xf32, #tpu.memory_space<vmem>>, vector<8x256xf32>,
    %c0_71 = arith.constant 0 : index
    %c0_72 = arith.constant 0 : index
    %c66 = arith.constant 66 : index
    %66 = vector.load %arg1[%c0_71, %c0_72, %c66] : memref<1x8x384xf32, #tpu.memory_space<vmem>>, vector<1x8x256xf32>
    %67 = vector.shape_cast %66 : vector<1x8x256xf32> to vector<8x256xf32>
    %c176 = arith.constant 176 : index
    %c0_73 = arith.constant 0 : index
    %68 = vector.load %arg4[%c176, %c0_73] : memref<200x256xf32, #tpu.memory_space<vmem>>, vector<8x256xf32>
    tpu.vector_store %arg4[%c176, %c0_73], %67 {strides = array<i32>} : memref<200x256xf32, #tpu.memory_space<vmem>>, vector<8x256xf32>,
    %c0_74 = arith.constant 0 : index
    %c0_75 = arith.constant 0 : index
    %c67 = arith.constant 67 : index
    %69 = vector.load %arg1[%c0_74, %c0_75, %c67] : memref<1x8x384xf32, #tpu.memory_space<vmem>>, vector<1x8x256xf32>
    %70 = vector.shape_cast %69 : vector<1x8x256xf32> to vector<8x256xf32>
    %c184 = arith.constant 184 : index
    %c0_76 = arith.constant 0 : index
    %71 = vector.load %arg4[%c184, %c0_76] : memref<200x256xf32, #tpu.memory_space<vmem>>, vector<8x256xf32>
    tpu.vector_store %arg4[%c184, %c0_76], %70 {strides = array<i32>} : memref<200x256xf32, #tpu.memory_space<vmem>>, vector<8x256xf32>,
    %c0_77 = arith.constant 0 : index
    %c0_78 = arith.constant 0 : index
    %c68 = arith.constant 68 : index
    %72 = vector.load %arg1[%c0_77, %c0_78, %c68] : memref<1x8x384xf32, #tpu.memory_space<vmem>>, vector<1x8x256xf32>
    %73 = vector.shape_cast %72 : vector<1x8x256xf32> to vector<8x256xf32>
    %c192 = arith.constant 192 : index
    %c0_79 = arith.constant 0 : index
    %74 = vector.load %arg4[%c192, %c0_79] : memref<200x256xf32, #tpu.memory_space<vmem>>, vector<8x256xf32>
    tpu.vector_store %arg4[%c192, %c0_79], %73 {strides = array<i32>} : memref<200x256xf32, #tpu.memory_space<vmem>>, vector<8x256xf32>,
    %c0_80 = arith.constant 0 : index
    %c0_81 = arith.constant 0 : index
    %75 = vector.load %arg2[%c0_80, %c0_81] : memref<8x200xf32, #tpu.memory_space<vmem>>, vector<8x200xf32>
    %c0_82 = arith.constant 0 : index
    %c0_83 = arith.constant 0 : index
    %76 = vector.load %arg4[%c0_82, %c0_83] : memref<200x256xf32, #tpu.memory_space<vmem>>, vector<200x256xf32>
    %cst = arith.constant dense<0.000000e+00> : vector<8x256xf32>
    %77 = tpu.matmul %75, %76, %cst {dimension_numbers = #tpu.dot_dimension_numbers<[1], [0], [0], [1], [0, 0, 1, 1], [], []>} : vector<8x200xf32>, vector<200x256xf32>, vector<8x256xf32> -> vector<8x256xf32>
    %c0_84 = arith.constant 0 : index
    %c0_85 = arith.constant 0 : index
    %c0_86 = arith.constant 0 : index
    %78 = vector.load %arg3[%c0_84, %c0_85, %c0_86] : memref<1x8x256xf32, #tpu.memory_space<vmem>>, vector<1x8x256xf32>
    %79 = vector.shape_cast %78 : vector<1x8x256xf32> to vector<8x256xf32>
    %80 = vector.shape_cast %77 : vector<8x256xf32> to vector<1x8x256xf32>
    tpu.vector_store %arg3[%c0_84, %c0_85, %c0_86], %80 {strides = array<i32>} : memref<1x8x256xf32, #tpu.memory_space<vmem>>, vector<1x8x256xf32>,
    return
  }
  func.func @transform_0(%arg0: i32) -> (i32, i32, i32) {
    %c0_i32 = arith.constant 0 : i32
    %c0_i32_0 = arith.constant 0 : i32
    %c0_i32_1 = arith.constant 0 : i32
    return %arg0, %c0_i32, %c0_i32_0 : i32, i32, i32
  }
  func.func @transform_1(%arg0: i32) -> (i32, i32) {
    %c0_i32 = arith.constant 0 : i32
    %c0_i32_0 = arith.constant 0 : i32
    %c0_i32_1 = arith.constant 0 : i32
    return %c0_i32, %c0_i32_0 : i32, i32
  }
  func.func @transform_2(%arg0: i32) -> (i32, i32, i32) {
    %c0_i32 = arith.constant 0 : i32
    %c0_i32_0 = arith.constant 0 : i32
    %c0_i32_1 = arith.constant 0 : i32
    return %arg0, %c0_i32, %c0_i32_0 : i32, i32, i32
  }
}

</mosaic_0001>

<llo_original>
// kernel: tpu_custom_call.1
$region0: #{tpu_custom_call.1}
  #allocation0 [shape = 'u32[]', space=smem, size = 0x4, offset = 0x4, fixed_abs, tag = 'smem constant byte address 0x4 - core index']
  #allocation1 [shape = 'u32[72,128]{1,0:T(1,128)}', space=vmem, size = 0x9000, scoped, tag = 'internal scratch']
  #allocation2 [shape = 'f32[200,256]{1,0:T(8,128)}', space=vmem, size = 0x32000, scoped, tag = 'scratch operand']
  %s0 = inlined_call_operand.hbm [shape: f32[2,8,384], index: 0, kind: input, shape index: {}]
  %s1 = inlined_call_operand.hbm [shape: f32[8,200], index: 1, kind: input, shape index: {}]
  %s2 = inlined_call_operand.hbm [shape: f32[2,8,256], index: 2, kind: output, shape index: {}]
  %s3 = sld [smem:[#allocation0]]
  $region49: #{tpu_custom_call.1} parent=0
    _
  %s5 = ssub.s32 1, %s3
  %s6 = scalar_select 0, %s5, %s3
  $region1: #{tpu_custom_call.1} parent=0
    #allocation3 [shape = 'u8[24576]{0}', space=vmem, size = 0x6000, scoped, tag = 'input window, operand 0']
    #allocation4 [shape = 's32[2]{0}', space=sflag, size = 0x8, scoped, tag = 'scoped memory for tpu_custom_call.1']
    #allocation5 [shape = 's32[2]{0}', space=sflag, size = 0x8, scoped, tag = 'scoped memory for tpu_custom_call.1']
    #allocation6 [shape = 'u8[8192]{0}', space=vmem, size = 0x2000, scoped, tag = 'input window, operand 1, single buffered']
    #allocation7 [shape = 's32[1]{0}', space=sflag, size = 0x4, scoped, tag = 'scoped memory for tpu_custom_call.1']
    #allocation8 [shape = 'u8[16384]{0}', space=vmem, size = 0x4000, scoped, tag = 'output window, operand 0']
    %7 = vsyncpa [#allocation4], 0
    %s8 = scalar_lea.sflag [#allocation4], 1
    %9 = vsyncpa %s8, 0
    %10 = vsyncpa [#allocation7], 0
    %11 = vsyncpa [#allocation5], 0
    %s12 = scalar_lea.sflag [#allocation5], 1
    %13 = vsyncpa %s12, 0
    loop: start=0, step=1, limit=4
    $region2: #{tpu_custom_call.1} parent=1 // loop_pre_header
      _
    $region3: #{tpu_custom_call.1} parent=1 // loop_header
      %s15 = sphi 0, %s19
      %p16 = scmp.ge.s32.totalorder %s15, 4
      %s25 = sphi 0, %s27
      %s28 = sphi 0, %s25
      %s29 = sphi 0, %s28
      %s45 = sphi 0, %s29
      %s49 = sphi 0, %s49
      %s51 = sphi 0, %s49
      %s52 = sphi 0, %s51
      %s66 = sphi 0, %s52
      %s72 = sphi 0, %s74
      %s75 = sphi 0, %s72
      %s76 = sphi 0, %s75
      %s92 = sphi 0, %s76
    $region4: #{tpu_custom_call.1} parent=1 // loop_header_branch
      %18 = sbr.rel (%p16) target = $region8
    $region5: #{tpu_custom_call.1} parent=1 // loop_body
      %s20 = ssub.s32 %s15, 1
      %s21 = ssub.s32 %s15, 2
      %s22 = sadd.s32 %s15, 1
      %s23 = ssub.s32 %s15, %s22
      %p24 = scmp.eq.s32.totalorder %s23, 0
      %s26 = sadd.s32 %s25, 1
      %s27 = scalar_select %p24, %s25, %s26
      %p30 = pneg %p24
      %p31 = scmp.eq.s32.totalorder %s15, 1
      %p32 = por %p30, %p31
      %p33 = scmp.ne.s32.totalorder %s25, %s28
      %p34 = scmp.eq.s32.totalorder %s15, 0
      %p35 = por %p33, %p34
      %p36 = scmp.ne.s32.totalorder %s25, %s28
      %p37 = scmp.eq.s32.totalorder %s20, 1
      %p38 = por %p36, %p37
      %p39 = scmp.ne.s32.totalorder %s28, %s29
      %p40 = scmp.eq.s32.totalorder %s20, 0
      %p41 = por %p39, %p40
      %p42 = scmp.ne.s32.totalorder %s28, %s29
      %p43 = scmp.eq.s32.totalorder %s21, 1
      %p44 = por %p42, %p43
      %p46 = scmp.ne.s32.totalorder %s29, %s45
      %p47 = scmp.eq.s32.totalorder %s21, 0
      %p48 = por %p46, %p47
      %s50 = sadd.s32 %s49, 1
      %p53 = scmp.eq.s32.totalorder %s15, 1
      %p54 = scmp.ne.s32.totalorder %s49, %s51
      %p55 = scmp.eq.s32.totalorder %s15, 0
      %p56 = por %p54, %p55
      %p57 = scmp.ne.s32.totalorder %s49, %s51
      %p58 = scmp.eq.s32.totalorder %s20, 1
      %p59 = por %p57, %p58
      %p60 = scmp.ne.s32.totalorder %s51, %s52
      %p61 = scmp.eq.s32.totalorder %s20, 0
      %p62 = por %p60, %p61
      %p63 = scmp.ne.s32.totalorder %s51, %s52
      %p64 = scmp.eq.s32.totalorder %s21, 1
      %p65 = por %p63, %p64
      %p67 = scmp.ne.s32.totalorder %s52, %s66
      %p68 = scmp.eq.s32.totalorder %s21, 0
      %p69 = por %p67, %p68
      %s70 = ssub.s32 %s15, %s22
      %p71 = scmp.eq.s32.totalorder %s70, 0
      %s73 = sadd.s32 %s72, 1
      %s74 = scalar_select %p71, %s72, %s73
      %p77 = pneg %p71
      %p78 = scmp.eq.s32.totalorder %s15, 1
      %p79 = por %p77, %p78
      %p80 = scmp.ne.s32.totalorder %s72, %s75
      %p81 = scmp.eq.s32.totalorder %s15, 0
      %p82 = por %p80, %p81
      %p83 = scmp.ne.s32.totalorder %s72, %s75
      %p84 = scmp.eq.s32.totalorder %s20, 1
      %p85 = por %p83, %p84
      %p86 = scmp.ne.s32.totalorder %s75, %s76
      %p87 = scmp.eq.s32.totalorder %s20, 0
      %p88 = por %p86, %p87
      %p89 = scmp.ne.s32.totalorder %s75, %s76
      %p90 = scmp.eq.s32.totalorder %s21, 1
      %p91 = por %p89, %p90
      %p93 = scmp.ne.s32.totalorder %s76, %s92
      %p94 = scmp.eq.s32.totalorder %s21, 0
      %p95 = por %p93, %p94
      %p96 = scmp.le.s32.totalorder 1, %s15
      %p97 = scmp.lt.s32.totalorder %s15, 3
      %p98 = pnand %p96, %p97
      %p99 = pneg %p98
      // Predicated region
      $region9: #{tpu_custom_call.1} parent=5 // pred_check
        _
      $region10: #{tpu_custom_call.1} parent=5 // pred_check_branch
        %101 = sbr.rel (%p98) target = $region12
      $region11: #{tpu_custom_call.1} parent=5 // pred_region
        %s102 = ssub.s32 %s15, 1
        // Predicated region
        $region13: #{tpu_custom_call.1} parent=11 // pred_check
          %p103 = pneg %p62
        $region14: #{tpu_custom_call.1} parent=11 // pred_check_branch
          %105 = sbr.rel (%p103) target = $region16
        $region15: #{tpu_custom_call.1} parent=11 // pred_region
          %107 = vsyncadd [#allocation7], 0
          %s109 = sshll.u32 %s1, 4
          %s110 = int_to_ptr.hbm [resolvable:$true] %s109
          %s111 = sshll.u32 [#allocation6], 4
          %s112 = int_to_ptr.vmem [resolvable:$true] %s111
          %114 = dma.hbm_to_vmem [thread:$0]  %s110, 256, %s112, [#allocation7]
        $region16: #{tpu_custom_call.1} parent=11 // pred_fallthru
          _
      $region12: #{tpu_custom_call.1} parent=5 // pred_fallthru
        _
      %p115 = scmp.lt.s32.totalorder %s15, 2
      // Predicated region
      $region17: #{tpu_custom_call.1} parent=5 // pred_check
        %p116 = pneg %p115
      $region18: #{tpu_custom_call.1} parent=5 // pred_check_branch
        %118 = sbr.rel (%p116) target = $region20
      $region19: #{tpu_custom_call.1} parent=5 // pred_region
        // Predicated region
        $region21: #{tpu_custom_call.1} parent=19 // pred_check
          %p119 = pneg %p35
        $region22: #{tpu_custom_call.1} parent=19 // pred_check_branch
          %121 = sbr.rel (%p119) target = $region24
        $region23: #{tpu_custom_call.1} parent=19 // pred_region
          %s122 = sand.u32 %s25, 1
          %s123 = scalar_lea.sflag [#allocation4], %s122
          %s124 = sand.u32 %s25, 1
          %s125 = smul.addr %s124, 24
          %s126 = scalar_lea.vmem [#allocation3], %s125
          %128 = vsyncadd %s123, 0
          %s129 = smul.addr %s15, 3
          %s130 = smul.addr %s129, 8
          %s131 = scalar_lea.hbm %s0, %s130
          %s133 = sshll.u32 %s131, 4
          %s134 = int_to_ptr.hbm [resolvable:$true] %s133
          %s135 = sshll.u32 %s126, 4
          %s136 = int_to_ptr.vmem [resolvable:$true] %s135
          %138 = dma.hbm_to_vmem [thread:$0]  %s134, 384, %s136, %s123
        $region24: #{tpu_custom_call.1} parent=19 // pred_fallthru
          _
      $region20: #{tpu_custom_call.1} parent=5 // pred_fallthru
        _
      %p139 = scmp.le.s32.totalorder 1, %s15
      %p140 = scmp.lt.s32.totalorder %s15, 3
      %p141 = pnand %p139, %p140
      %p142 = pneg %p141
      // Predicated region
      $region25: #{tpu_custom_call.1} parent=5 // pred_check
        _
      $region26: #{tpu_custom_call.1} parent=5 // pred_check_branch
        %144 = sbr.rel (%p141) target = $region28
      $region27: #{tpu_custom_call.1} parent=5 // pred_region
        %s145 = ssub.s32 %s15, 1
        %s146 = sand.u32 %s28, 1
        %s147 = scalar_lea.sflag [#allocation4], %s146
        %s148 = sand.u32 %s28, 1
        %s149 = smul.addr %s148, 24
        %s150 = scalar_lea.vmem [#allocation3], %s149
        // Predicated region
        $region29: #{tpu_custom_call.1} parent=27 // pred_check
          %p151 = pneg %p41
        $region30: #{tpu_custom_call.1} parent=27 // pred_check_branch
          %153 = sbr.rel (%p151) target = $region32
        $region31: #{tpu_custom_call.1} parent=27 // pred_region
          %155 = dma.done %s147, 384
        $region32: #{tpu_custom_call.1} parent=27 // pred_fallthru
          _
        // Predicated region
        $region33: #{tpu_custom_call.1} parent=27 // pred_check
          %p156 = pneg %p62
        $region34: #{tpu_custom_call.1} parent=27 // pred_check_branch
          %158 = sbr.rel (%p156) target = $region36
        $region35: #{tpu_custom_call.1} parent=27 // pred_region
          %160 = dma.done [#allocation7], 256
        $region36: #{tpu_custom_call.1} parent=27 // pred_fallthru
          _
        %s161 = sand.u32 %s28, 1
        %s162 = scalar_lea.sflag [#allocation4], %s161
        %s163 = sand.u32 %s28, 1
        %s164 = smul.addr %s163, 24
        %s165 = scalar_lea.vmem [#allocation3], %s164
        %p166 = pneg %p41
        %p167 = pneg %p38
        %p168 = pneg %p62
        %p169 = pneg %p59
        %p170 = pneg %p88
        %p171 = pneg %p85
        %s172 = sand.u32 %s75, 1
        %s173 = scalar_lea.sflag [#allocation5], %s172
        %s174 = sand.u32 %s75, 1
        %s175 = smul.addr %s174, 16
        %s176 = scalar_lea.vmem [#allocation8], %s175
        %v177 = vld [vmem:[%s150] sm:$0xff]
        %v178 = vld [vmem:[%s150 + $0x8] sm:$0xff]
        %179 = vst [vmem:[#allocation2] sm:$0xff] %v177
        %180 = vst [vmem:[#allocation2 + $0x8] sm:$0xff] %v178
        %v181 = vld [vmem:[%s150] sm:$0xff]
        %v182 = vld [vmem:[%s150 + $0x8] sm:$0xff]
        %v183 = vld [vmem:[%s150 + $0x10] sm:$0xff]
        %187 = vrot.lane.b32.xlu0 %v181, 127
        %v188 = vpop.permute.xlu0 %187
        %189 = vrot.lane.b32.xlu0 %v182, 127
        %v190 = vpop.permute.xlu0 %189
        %191 = vrot.lane.b32.xlu0 %v183, 127
        %v192 = vpop.permute.xlu0 %191
        %vm193 = vcmask 1039360
        %v194 = vsel %vm193, %v188, %v190
        %v195 = vsel %vm193, %v190, %v192
        %198 = vst [vmem:[#allocation2 + $0x10] sm:$0xff] %v194
        %199 = vst [vmem:[#allocation2 + $0x18] sm:$0xff] %v195
        %v200 = vld [vmem:[%s150] sm:$0xff]
        %v201 = vld [vmem:[%s150 + $0x8] sm:$0xff]
        %v202 = vld [vmem:[%s150 + $0x10] sm:$0xff]
        %206 = vrot.lane.b32.xlu0 %v200, 126
        %v207 = vpop.permute.xlu0 %206
        %208 = vrot.lane.b32.xlu0 %v201, 126
        %v209 = vpop.permute.xlu0 %208
        %210 = vrot.lane.b32.xlu0 %v202, 126
        %v211 = vpop.permute.xlu0 %210
        %vm212 = vcmask 1031168
        %v213 = vsel %vm212, %v207, %v209
        %v214 = vsel %vm212, %v209, %v211
        %217 = vst [vmem:[#allocation2 + $0x20] sm:$0xff] %v213
        %218 = vst [vmem:[#allocation2 + $0x28] sm:$0xff] %v214
        %v219 = vld [vmem:[%s150] sm:$0xff]
        %v220 = vld [vmem:[%s150 + $0x8] sm:$0xff]
        %v221 = vld [vmem:[%s150 + $0x10] sm:$0xff]
        %225 = vrot.lane.b32.xlu0 %v219, 125
        %v226 = vpop.permute.xlu0 %225
        %227 = vrot.lane.b32.xlu0 %v220, 125
        %v228 = vpop.permute.xlu0 %227
        %229 = vrot.lane.b32.xlu0 %v221, 125
        %v230 = vpop.permute.xlu0 %229
        %vm231 = vcmask 1022976
        %v232 = vsel %vm231, %v226, %v228
        %v233 = vsel %vm231, %v228, %v230
        %236 = vst [vmem:[#allocation2 + $0x30] sm:$0xff] %v232
        %237 = vst [vmem:[#allocation2 + $0x38] sm:$0xff] %v233
        %v238 = vld [vmem:[%s150] sm:$0xff]
        %v239 = vld [vmem:[%s150 + $0x8] sm:$0xff]
        %v240 = vld [vmem:[%s150 + $0x10] sm:$0xff]
        %244 = vrot.lane.b32.xlu0 %v238, 124
        %v245 = vpop.permute.xlu0 %244
        %246 = vrot.lane.b32.xlu0 %v239, 124
        %v247 = vpop.permute.xlu0 %246
        %248 = vrot.lane.b32.xlu0 %v240, 124
        %v249 = vpop.permute.xlu0 %248
        %vm250 = vcmask 1014784
        %v251 = vsel %vm250, %v245, %v247
        %v252 = vsel %vm250, %v247, %v249
        %255 = vst [vmem:[#allocation2 + $0x40] sm:$0xff] %v251
        %256 = vst [vmem:[#allocation2 + $0x48] sm:$0xff] %v252
        %v257 = vld [vmem:[%s150] sm:$0xff]
        %v258 = vld [vmem:[%s150 + $0x8] sm:$0xff]
        %v259 = vld [vmem:[%s150 + $0x10] sm:$0xff]
        %263 = vrot.lane.b32.xlu0 %v257, 112
        %v264 = vpop.permute.xlu0 %263
        %265 = vrot.lane.b32.xlu0 %v258, 112
        %v266 = vpop.permute.xlu0 %265
        %267 = vrot.lane.b32.xlu0 %v259, 112
        %v268 = vpop.permute.xlu0 %267
        %vm269 = vcmask 916480
        %v270 = vsel %vm269, %v264, %v266
        %v271 = vsel %vm269, %v266, %v268
        %274 = vst [vmem:[#allocation2 + $0x50] sm:$0xff] %v270
        %275 = vst [vmem:[#allocation2 + $0x58] sm:$0xff] %v271
        %v276 = vld [vmem:[%s150] sm:$0xff]
        %v277 = vld [vmem:[%s150 + $0x8] sm:$0xff]
        %v278 = vld [vmem:[%s150 + $0x10] sm:$0xff]
        %282 = vrot.lane.b32.xlu0 %v276, 111
        %v283 = vpop.permute.xlu0 %282
        %284 = vrot.lane.b32.xlu0 %v277, 111
        %v285 = vpop.permute.xlu0 %284
        %286 = vrot.lane.b32.xlu0 %v278, 111
        %v287 = vpop.permute.xlu0 %286
        %vm288 = vcmask 908288
        %v289 = vsel %vm288, %v283, %v285
        %v290 = vsel %vm288, %v285, %v287
        %293 = vst [vmem:[#allocation2 + $0x60] sm:$0xff] %v289
        %294 = vst [vmem:[#allocation2 + $0x68] sm:$0xff] %v290
        %v295 = vld [vmem:[%s150] sm:$0xff]
        %v296 = vld [vmem:[%s150 + $0x8] sm:$0xff]
        %v297 = vld [vmem:[%s150 + $0x10] sm:$0xff]
        %301 = vrot.lane.b32.xlu0 %v295, 110
        %v302 = vpop.permute.xlu0 %301
        %303 = vrot.lane.b32.xlu0 %v296, 110
        %v304 = vpop.permute.xlu0 %303
        %305 = vrot.lane.b32.xlu0 %v297, 110
        %v306 = vpop.permute.xlu0 %305
        %vm307 = vcmask 900096
        %v308 = vsel %vm307, %v302, %v304
        %v309 = vsel %vm307, %v304, %v306
        %312 = vst [vmem:[#allocation2 + $0x70] sm:$0xff] %v308
        %313 = vst [vmem:[#allocation2 + $0x78] sm:$0xff] %v309
        %v314 = vld [vmem:[%s150] sm:$0xff]
        %v315 = vld [vmem:[%s150 + $0x8] sm:$0xff]
        %v316 = vld [vmem:[%s150 + $0x10] sm:$0xff]
        %320 = vrot.lane.b32.xlu0 %v314, 109
        %v321 = vpop.permute.xlu0 %320
        %322 = vrot.lane.b32.xlu0 %v315, 109
        %v323 = vpop.permute.xlu0 %322
        %324 = vrot.lane.b32.xlu0 %v316, 109
        %v325 = vpop.permute.xlu0 %324
        %vm326 = vcmask 891904
        %v327 = vsel %vm326, %v321, %v323
        %v328 = vsel %vm326, %v323, %v325
        %331 = vst [vmem:[#allocation2 + $0x80] sm:$0xff] %v327
        %332 = vst [vmem:[#allocation2 + $0x88] sm:$0xff] %v328
        %v333 = vld [vmem:[%s150] sm:$0xff]
        %v334 = vld [vmem:[%s150 + $0x8] sm:$0xff]
        %v335 = vld [vmem:[%s150 + $0x10] sm:$0xff]
        %339 = vrot.lane.b32.xlu0 %v333, 108
        %v340 = vpop.permute.xlu0 %339
        %341 = vrot.lane.b32.xlu0 %v334, 108
        %v342 = vpop.permute.xlu0 %341
        %343 = vrot.lane.b32.xlu0 %v335, 108
        %v344 = vpop.permute.xlu0 %343
        %vm345 = vcmask 883712
        %v346 = vsel %vm345, %v340, %v342
        %v347 = vsel %vm345, %v342, %v344
        %350 = vst [vmem:[#allocation2 + $0x90] sm:$0xff] %v346
        %351 = vst [vmem:[#allocation2 + $0x98] sm:$0xff] %v347
        %v352 = vld [vmem:[%s150] sm:$0xff]
        %v353 = vld [vmem:[%s150 + $0x8] sm:$0xff]
        %v354 = vld [vmem:[%s150 + $0x10] sm:$0xff]
        %358 = vrot.lane.b32.xlu0 %v352, 96
        %v359 = vpop.permute.xlu0 %358
        %360 = vrot.lane.b32.xlu0 %v353, 96
        %v361 = vpop.permute.xlu0 %360
        %362 = vrot.lane.b32.xlu0 %v354, 96
        %v363 = vpop.permute.xlu0 %362
        %vm364 = vcmask 785408
        %v365 = vsel %vm364, %v359, %v361
        %v366 = vsel %vm364, %v361, %v363
        %369 = vst [vmem:[#allocation2 + $0xa0] sm:$0xff] %v365
        %370 = vst [vmem:[#allocation2 + $0xa8] sm:$0xff] %v366
        %v371 = vld [vmem:[%s150] sm:$0xff]
        %v372 = vld [vmem:[%s150 + $0x8] sm:$0xff]
        %v373 = vld [vmem:[%s150 + $0x10] sm:$0xff]
        %377 = vrot.lane.b32.xlu0 %v371, 95
        %v378 = vpop.permute.xlu0 %377
        %379 = vrot.lane.b32.xlu0 %v372, 95
        %v380 = vpop.permute.xlu0 %379
        %381 = vrot.lane.b32.xlu0 %v373, 95
        %v382 = vpop.permute.xlu0 %381
        %vm383 = vcmask 777216
        %v384 = vsel %vm383, %v378, %v380
        %v385 = vsel %vm383, %v380, %v382
        %388 = vst [vmem:[#allocation2 + $0xb0] sm:$0xff] %v384
        %389 = vst [vmem:[#allocation2 + $0xb8] sm:$0xff] %v385
        %v390 = vld [vmem:[%s150] sm:$0xff]
        %v391 = vld [vmem:[%s150 + $0x8] sm:$0xff]
        %v392 = vld [vmem:[%s150 + $0x10] sm:$0xff]
        %396 = vrot.lane.b32.xlu0 %v390, 94
        %v397 = vpop.permute.xlu0 %396
        %398 = vrot.lane.b32.xlu0 %v391, 94
        %v399 = vpop.permute.xlu0 %398
        %400 = vrot.lane.b32.xlu0 %v392, 94
        %v401 = vpop.permute.xlu0 %400
        %vm402 = vcmask 769024
        %v403 = vsel %vm402, %v397, %v399
        %v404 = vsel %vm402, %v399, %v401
        %407 = vst [vmem:[#allocation2 + $0xc0] sm:$0xff] %v403
        %408 = vst [vmem:[#allocation2 + $0xc8] sm:$0xff] %v404
        %v409 = vld [vmem:[%s150] sm:$0xff]
        %v410 = vld [vmem:[%s150 + $0x8] sm:$0xff]
        %v411 = vld [vmem:[%s150 + $0x10] sm:$0xff]
        %415 = vrot.lane.b32.xlu0 %v409, 93
        %v416 = vpop.permute.xlu0 %415
        %417 = vrot.lane.b32.xlu0 %v410, 93
        %v418 = vpop.permute.xlu0 %417
        %419 = vrot.lane.b32.xlu0 %v411, 93
        %v420 = vpop.permute.xlu0 %419
        %vm421 = vcmask 760832
        %v422 = vsel %vm421, %v416, %v418
        %v423 = vsel %vm421, %v418, %v420
        %426 = vst [vmem:[#allocation2 + $0xd0] sm:$0xff] %v422
        %427 = vst [vmem:[#allocation2 + $0xd8] sm:$0xff] %v423
        %v428 = vld [vmem:[%s150] sm:$0xff]
        %v429 = vld [vmem:[%s150 + $0x8] sm:$0xff]
        %v430 = vld [vmem:[%s150 + $0x10] sm:$0xff]
        %434 = vrot.lane.b32.xlu0 %v428, 92
        %v435 = vpop.permute.xlu0 %434
        %436 = vrot.lane.b32.xlu0 %v429, 92
        %v437 = vpop.permute.xlu0 %436
        %438 = vrot.lane.b32.xlu0 %v430, 92
        %v439 = vpop.permute.xlu0 %438
        %vm440 = vcmask 752640
        %v441 = vsel %vm440, %v435, %v437
        %v442 = vsel %vm440, %v437, %v439
        %445 = vst [vmem:[#allocation2 + $0xe0] sm:$0xff] %v441
        %446 = vst [vmem:[#allocation2 + $0xe8] sm:$0xff] %v442
        %v447 = vld [vmem:[%s150] sm:$0xff]
        %v448 = vld [vmem:[%s150 + $0x8] sm:$0xff]
        %v449 = vld [vmem:[%s150 + $0x10] sm:$0xff]
        %453 = vrot.lane.b32.xlu0 %v447, 80
        %v454 = vpop.permute.xlu0 %453
        %455 = vrot.lane.b32.xlu0 %v448, 80
        %v456 = vpop.permute.xlu0 %455
        %457 = vrot.lane.b32.xlu0 %v449, 80
        %v458 = vpop.permute.xlu0 %457
        %vm459 = vcmask 654336
        %v460 = vsel %vm459, %v454, %v456
        %v461 = vsel %vm459, %v456, %v458
        %464 = vst [vmem:[#allocation2 + $0xf0] sm:$0xff] %v460
        %465 = vst [vmem:[#allocation2 + $0xf8] sm:$0xff] %v461
        %v466 = vld [vmem:[%s150] sm:$0xff]
        %v467 = vld [vmem:[%s150 + $0x8] sm:$0xff]
        %v468 = vld [vmem:[%s150 + $0x10] sm:$0xff]
        %472 = vrot.lane.b32.xlu0 %v466, 79
        %v473 = vpop.permute.xlu0 %472
        %474 = vrot.lane.b32.xlu0 %v467, 79
        %v475 = vpop.permute.xlu0 %474
        %476 = vrot.lane.b32.xlu0 %v468, 79
        %v477 = vpop.permute.xlu0 %476
        %vm478 = vcmask 646144
        %v479 = vsel %vm478, %v473, %v475
        %v480 = vsel %vm478, %v475, %v477
        %483 = vst [vmem:[#allocation2 + $0x100] sm:$0xff] %v479
        %484 = vst [vmem:[#allocation2 + $0x108] sm:$0xff] %v480
        %v485 = vld [vmem:[%s150] sm:$0xff]
        %v486 = vld [vmem:[%s150 + $0x8] sm:$0xff]
        %v487 = vld [vmem:[%s150 + $0x10] sm:$0xff]
        %491 = vrot.lane.b32.xlu0 %v485, 78
        %v492 = vpop.permute.xlu0 %491
        %493 = vrot.lane.b32.xlu0 %v486, 78
        %v494 = vpop.permute.xlu0 %493
        %495 = vrot.lane.b32.xlu0 %v487, 78
        %v496 = vpop.permute.xlu0 %495
        %vm497 = vcmask 637952
        %v498 = vsel %vm497, %v492, %v494
        %v499 = vsel %vm497, %v494, %v496
        %502 = vst [vmem:[#allocation2 + $0x110] sm:$0xff] %v498
        %503 = vst [vmem:[#allocation2 + $0x118] sm:$0xff] %v499
        %v504 = vld [vmem:[%s150] sm:$0xff]
        %v505 = vld [vmem:[%s150 + $0x8] sm:$0xff]
        %v506 = vld [vmem:[%s150 + $0x10] sm:$0xff]
        %510 = vrot.lane.b32.xlu0 %v504, 77
        %v511 = vpop.permute.xlu0 %510
        %512 = vrot.lane.b32.xlu0 %v505, 77
        %v513 = vpop.permute.xlu0 %512
        %514 = vrot.lane.b32.xlu0 %v506, 77
        %v515 = vpop.permute.xlu0 %514
        %vm516 = vcmask 629760
        %v517 = vsel %vm516, %v511, %v513
        %v518 = vsel %vm516, %v513, %v515
        %521 = vst [vmem:[#allocation2 + $0x120] sm:$0xff] %v517
        %522 = vst [vmem:[#allocation2 + $0x128] sm:$0xff] %v518
        %v523 = vld [vmem:[%s150] sm:$0xff]
        %v524 = vld [vmem:[%s150 + $0x8] sm:$0xff]
        %v525 = vld [vmem:[%s150 + $0x10] sm:$0xff]
        %529 = vrot.lane.b32.xlu0 %v523, 76
        %v530 = vpop.permute.xlu0 %529
        %531 = vrot.lane.b32.xlu0 %v524, 76
        %v532 = vpop.permute.xlu0 %531
        %533 = vrot.lane.b32.xlu0 %v525, 76
        %v534 = vpop.permute.xlu0 %533
        %vm535 = vcmask 621568
        %v536 = vsel %vm535, %v530, %v532
        %v537 = vsel %vm535, %v532, %v534
        %540 = vst [vmem:[#allocation2 + $0x130] sm:$0xff] %v536
        %541 = vst [vmem:[#allocation2 + $0x138] sm:$0xff] %v537
        %v542 = vld [vmem:[%s150] sm:$0xff]
        %v543 = vld [vmem:[%s150 + $0x8] sm:$0xff]
        %v544 = vld [vmem:[%s150 + $0x10] sm:$0xff]
        %548 = vrot.lane.b32.xlu0 %v542, 64
        %v549 = vpop.permute.xlu0 %548
        %550 = vrot.lane.b32.xlu0 %v543, 64
        %v551 = vpop.permute.xlu0 %550
        %552 = vrot.lane.b32.xlu0 %v544, 64
        %v553 = vpop.permute.xlu0 %552
        %vm554 = vcmask 523264
        %v555 = vsel %vm554, %v549, %v551
        %v556 = vsel %vm554, %v551, %v553
        %559 = vst [vmem:[#allocation2 + $0x140] sm:$0xff] %v555
        %560 = vst [vmem:[#allocation2 + $0x148] sm:$0xff] %v556
        %v561 = vld [vmem:[%s150] sm:$0xff]
        %v562 = vld [vmem:[%s150 + $0x8] sm:$0xff]
        %v563 = vld [vmem:[%s150 + $0x10] sm:$0xff]
        %567 = vrot.lane.b32.xlu0 %v561, 63
        %v568 = vpop.permute.xlu0 %567
        %569 = vrot.lane.b32.xlu0 %v562, 63
        %v570 = vpop.permute.xlu0 %569
        %571 = vrot.lane.b32.xlu0 %v563, 63
        %v572 = vpop.permute.xlu0 %571
        %vm573 = vcmask 515072
        %v574 = vsel %vm573, %v568, %v570
        %v575 = vsel %vm573, %v570, %v572
        %578 = vst [vmem:[#allocation2 + $0x150] sm:$0xff] %v574
        %579 = vst [vmem:[#allocation2 + $0x158] sm:$0xff] %v575
        %v580 = vld [vmem:[%s150] sm:$0xff]
        %v581 = vld [vmem:[%s150 + $0x8] sm:$0xff]
        %v582 = vld [vmem:[%s150 + $0x10] sm:$0xff]
        %586 = vrot.lane.b32.xlu0 %v580, 62
        %v587 = vpop.permute.xlu0 %586
        %588 = vrot.lane.b32.xlu0 %v581, 62
        %v589 = vpop.permute.xlu0 %588
        %590 = vrot.lane.b32.xlu0 %v582, 62
        %v591 = vpop.permute.xlu0 %590
        %vm592 = vcmask 506880
        %v593 = vsel %vm592, %v587, %v589
        %v594 = vsel %vm592, %v589, %v591
        %597 = vst [vmem:[#allocation2 + $0x160] sm:$0xff] %v593
        %598 = vst [vmem:[#allocation2 + $0x168] sm:$0xff] %v594
        %v599 = vld [vmem:[%s150] sm:$0xff]
        %v600 = vld [vmem:[%s150 + $0x8] sm:$0xff]
        %v601 = vld [vmem:[%s150 + $0x10] sm:$0xff]
        %605 = vrot.lane.b32.xlu0 %v599, 61
        %v606 = vpop.permute.xlu0 %605
        %607 = vrot.lane.b32.xlu0 %v600, 61
        %v608 = vpop.permute.xlu0 %607
        %609 = vrot.lane.b32.xlu0 %v601, 61
        %v610 = vpop.permute.xlu0 %609
        %vm611 = vcmask 498688
        %v612 = vsel %vm611, %v606, %v608
        %v613 = vsel %vm611, %v608, %v610
        %616 = vst [vmem:[#allocation2 + $0x170] sm:$0xff] %v612
        %617 = vst [vmem:[#allocation2 + $0x178] sm:$0xff] %v613
        %v618 = vld [vmem:[%s150] sm:$0xff]
        %v619 = vld [vmem:[%s150 + $0x8] sm:$0xff]
        %v620 = vld [vmem:[%s150 + $0x10] sm:$0xff]
        %624 = vrot.lane.b32.xlu0 %v618, 60
        %v625 = vpop.permute.xlu0 %624
        %626 = vrot.lane.b32.xlu0 %v619, 60
        %v627 = vpop.permute.xlu0 %626
        %628 = vrot.lane.b32.xlu0 %v620, 60
        %v629 = vpop.permute.xlu0 %628
        %vm630 = vcmask 490496
        %v631 = vsel %vm630, %v625, %v627
        %v632 = vsel %vm630, %v627, %v629
        %635 = vst [vmem:[#allocation2 + $0x180] sm:$0xff] %v631
        %636 = vst [vmem:[#allocation2 + $0x188] sm:$0xff] %v632
        %v637 = vld [vmem:[#allocation6] sm:$0xff]
        %v638 = vld [vmem:[#allocation6 + $0x8] sm:$0xff]
        %v639 = vld [vmem:[#allocation2] sm:$0xff]
        %v640 = vld [vmem:[#allocation2 + $0x8] sm:$0xff]
        %v641 = vld [vmem:[#allocation2 + $0x10] sm:$0xff]
        %v642 = vld [vmem:[#allocation2 + $0x18] sm:$0xff]
        %v643 = vld [vmem:[#allocation2 + $0x20] sm:$0xff]
        %v644 = vld [vmem:[#allocation2 + $0x28] sm:$0xff]
        %v645 = vld [vmem:[#allocation2 + $0x30] sm:$0xff]
        %v646 = vld [vmem:[#allocation2 + $0x38] sm:$0xff]
        %v647 = vld [vmem:[#allocation2 + $0x40] sm:$0xff]
        %v648 = vld [vmem:[#allocation2 + $0x48] sm:$0xff]
        %v649 = vld [vmem:[#allocation2 + $0x50] sm:$0xff]
        %v650 = vld [vmem:[#allocation2 + $0x58] sm:$0xff]
        %v651 = vld [vmem:[#allocation2 + $0x60] sm:$0xff]
        %v652 = vld [vmem:[#allocation2 + $0x68] sm:$0xff]
        %v653 = vld [vmem:[#allocation2 + $0x70] sm:$0xff]
        %v654 = vld [vmem:[#allocation2 + $0x78] sm:$0xff]
        %v655 = vld [vmem:[#allocation2 + $0x80] sm:$0xff]
        %v656 = vld [vmem:[#allocation2 + $0x88] sm:$0xff]
        %v657 = vld [vmem:[#allocation2 + $0x90] sm:$0xff]
        %v658 = vld [vmem:[#allocation2 + $0x98] sm:$0xff]
        %v659 = vld [vmem:[#allocation2 + $0xa0] sm:$0xff]
        %v660 = vld [vmem:[#allocation2 + $0xa8] sm:$0xff]
        %v661 = vld [vmem:[#allocation2 + $0xb0] sm:$0xff]
        %v662 = vld [vmem:[#allocation2 + $0xb8] sm:$0xff]
        %v663 = vld [vmem:[#allocation2 + $0xc0] sm:$0xff]
        %v664 = vld [vmem:[#allocation2 + $0xc8] sm:$0xff]
        %v665 = vld [vmem:[#allocation2 + $0xd0] sm:$0xff]
        %v666 = vld [vmem:[#allocation2 + $0xd8] sm:$0xff]
        %v667 = vld [vmem:[#allocation2 + $0xe0] sm:$0xff]
        %v668 = vld [vmem:[#allocation2 + $0xe8] sm:$0xff]
        %v669 = vld [vmem:[#allocation2 + $0xf0] sm:$0xff]
        %v670 = vld [vmem:[#allocation2 + $0xf8] sm:$0xff]
        %v671 = vld [vmem:[#allocation2 + $0x100] sm:$0xff]
        %v672 = vld [vmem:[#allocation2 + $0x108] sm:$0xff]
        %v673 = vld [vmem:[#allocation2 + $0x110] sm:$0xff]
        %v674 = vld [vmem:[#allocation2 + $0x118] sm:$0xff]
        %v675 = vld [vmem:[#allocation2 + $0x120] sm:$0xff]
        %v676 = vld [vmem:[#allocation2 + $0x128] sm:$0xff]
        %v677 = vld [vmem:[#allocation2 + $0x130] sm:$0xff]
        %v678 = vld [vmem:[#allocation2 + $0x138] sm:$0xff]
        %v679 = vld [vmem:[#allocation2 + $0x140] sm:$0xff]
        %v680 = vld [vmem:[#allocation2 + $0x148] sm:$0xff]
        %v681 = vld [vmem:[#allocation2 + $0x150] sm:$0xff]
        %v682 = vld [vmem:[#allocation2 + $0x158] sm:$0xff]
        %v683 = vld [vmem:[#allocation2 + $0x160] sm:$0xff]
        %v684 = vld [vmem:[#allocation2 + $0x168] sm:$0xff]
        %v685 = vld [vmem:[#allocation2 + $0x170] sm:$0xff]
        %v686 = vld [vmem:[#allocation2 + $0x178] sm:$0xff]
        %v687 = vld [vmem:[#allocation2 + $0x180] sm:$0xff]
        %v688 = vld [vmem:[#allocation2 + $0x188] sm:$0xff]
        %vm689 = vcmask 588800
        %v691 = vsel %vm689, %v638, 0
        %693 = vmatpush.msra.mxu0 %v669
        %694 = vmatpush.msra.mxu0 %v667
        %695 = vmatpush.msra.mxu0 %v665
        %696 = vmatpush.msra.mxu0 %v663
        %697 = vmatpush.msra.mxu0 %v661
        %698 = vmatpush.msra.mxu0 %v659
        %699 = vmatpush.msra.mxu0 %v657
        %700 = vmatpush.msra.mxu0 %v655
        %701 = vmatpush.msra.mxu0 %v653
        %702 = vmatpush.msra.mxu0 %v651
        %703 = vmatpush.msra.mxu0 %v649
        %704 = vmatpush.msra.mxu0 %v647
        %705 = vmatpush.msra.mxu0 %v645
        %706 = vmatpush.msra.mxu0 %v643
        %707 = vmatpush.msra.mxu0 %v641
        %708 = vmatpush.msra.mxu0 %v639
        %709 = vmatmul.f32.gmra.mxu0 %v637
        %v710 = vpop.f32.mrf.mxu0
        %v711 = vadd.f32 0.0, %v710
        %712 = vdwg.mxu0
        %713 = vmatpush.msra.mxu0 0.0
        %714 = vmatpush.msra.mxu0 0.0
        %715 = vmatpush.msra.mxu0 0.0
        %716 = vmatpush.msra.mxu0 0.0
        %717 = vmatpush.msra.mxu0 0.0
        %718 = vmatpush.msra.mxu0 0.0
        %719 = vmatpush.msra.mxu0 0.0
        %720 = vmatpush.msra.mxu0 %v687
        %721 = vmatpush.msra.mxu0 %v685
        %722 = vmatpush.msra.mxu0 %v683
        %723 = vmatpush.msra.mxu0 %v681
        %724 = vmatpush.msra.mxu0 %v679
        %725 = vmatpush.msra.mxu0 %v677
        %726 = vmatpush.msra.mxu0 %v675
        %727 = vmatpush.msra.mxu0 %v673
        %728 = vmatpush.msra.mxu0 %v671
        %729 = vmatmul.f32.gmra.mxu0 %v691
        %v730 = vpop.f32.mrf.mxu0
        %v731 = vadd.f32 %v711, %v730
        %732 = vdwg.mxu0
        %733 = vmatpush.msra.mxu0 %v670
        %734 = vmatpush.msra.mxu0 %v668
        %735 = vmatpush.msra.mxu0 %v666
        %736 = vmatpush.msra.mxu0 %v664
        %737 = vmatpush.msra.mxu0 %v662
        %738 = vmatpush.msra.mxu0 %v660
        %739 = vmatpush.msra.mxu0 %v658
        %740 = vmatpush.msra.mxu0 %v656
        %741 = vmatpush.msra.mxu0 %v654
        %742 = vmatpush.msra.mxu0 %v652
        %743 = vmatpush.msra.mxu0 %v650
        %744 = vmatpush.msra.mxu0 %v648
        %745 = vmatpush.msra.mxu0 %v646
        %746 = vmatpush.msra.mxu0 %v644
        %747 = vmatpush.msra.mxu0 %v642
        %748 = vmatpush.msra.mxu0 %v640
        %749 = vmatmul.f32.gmra.mxu0 %v637
        %v750 = vpop.f32.mrf.mxu0
        %v751 = vadd.f32 0.0, %v750
        %752 = vdwg.mxu0
        %753 = vmatpush.msra.mxu0 0.0
        %754 = vmatpush.msra.mxu0 0.0
        %755 = vmatpush.msra.mxu0 0.0
        %756 = vmatpush.msra.mxu0 0.0
        %757 = vmatpush.msra.mxu0 0.0
        %758 = vmatpush.msra.mxu0 0.0
        %759 = vmatpush.msra.mxu0 0.0
        %760 = vmatpush.msra.mxu0 %v688
        %761 = vmatpush.msra.mxu0 %v686
        %762 = vmatpush.msra.mxu0 %v684
        %763 = vmatpush.msra.mxu0 %v682
        %764 = vmatpush.msra.mxu0 %v680
        %765 = vmatpush.msra.mxu0 %v678
        %766 = vmatpush.msra.mxu0 %v676
        %767 = vmatpush.msra.mxu0 %v674
        %768 = vmatpush.msra.mxu0 %v672
        %769 = vmatmul.f32.gmra.mxu0 %v691
        %v770 = vpop.f32.mrf.mxu0
        %v771 = vadd.f32 %v751, %v770
        %772 = vdwg.mxu0
        %773 = vst [vmem:[%s176] sm:$0xff] %v731
        %774 = vst [vmem:[%s176 + $0x8] sm:$0xff] %v771
        %s775 = sand.u32 %s75, 1
        %s776 = scalar_lea.sflag [#allocation5], %s775
        %s777 = sand.u32 %s75, 1
        %s778 = smul.addr %s777, 16
        %s779 = scalar_lea.vmem [#allocation8], %s778
        // Predicated region
        $region37: #{tpu_custom_call.1} parent=27 // pred_check
          %p780 = pneg %p85
        $region38: #{tpu_custom_call.1} parent=27 // pred_check_branch
          %782 = sbr.rel (%p780) target = $region40
        $region39: #{tpu_custom_call.1} parent=27 // pred_region
          %784 = vsyncadd %s776, 0
          %s785 = smul.addr %s20, 2
          %s786 = smul.addr %s785, 8
          %s787 = scalar_lea.hbm %s2, %s786
          %s789 = sshll.u32 %s779, 4
          %s790 = int_to_ptr.vmem [resolvable:$true] %s789
          %s791 = sshll.u32 %s787, 4
          %s792 = int_to_ptr.hbm [resolvable:$true] %s791
          %794 = dma.vmem_to_hbm [thread:$0]  %s790, 256, %s792, %s776
        $region40: #{tpu_custom_call.1} parent=27 // pred_fallthru
          _
      $region28: #{tpu_custom_call.1} parent=5 // pred_fallthru
        _
      %p795 = scmp.le.s32.totalorder 2, %s15
      // Predicated region
      $region41: #{tpu_custom_call.1} parent=5 // pred_check
        %p796 = pneg %p795
      $region42: #{tpu_custom_call.1} parent=5 // pred_check_branch
        %798 = sbr.rel (%p796) target = $region44
      $region43: #{tpu_custom_call.1} parent=5 // pred_region
        %s799 = ssub.s32 %s15, 2
        // Predicated region
        $region45: #{tpu_custom_call.1} parent=43 // pred_check
          %p800 = pneg %p91
        $region46: #{tpu_custom_call.1} parent=43 // pred_check_branch
          %802 = sbr.rel (%p800) target = $region48
        $region47: #{tpu_custom_call.1} parent=43 // pred_region
          %s803 = sand.u32 %s76, 1
          %s804 = scalar_lea.sflag [#allocation5], %s803
          %s805 = sand.u32 %s76, 1
          %s806 = smul.addr %s805, 16
          %s807 = scalar_lea.vmem [#allocation8], %s806
          %809 = dma.done %s804, 256
        $region48: #{tpu_custom_call.1} parent=43 // pred_fallthru
          _
      $region44: #{tpu_custom_call.1} parent=5 // pred_fallthru
        _
    $region6: #{tpu_custom_call.1} parent=1 // loop_footer
      %s19 = sadd.s32 1, %s15
    $region7: #{tpu_custom_call.1} parent=1 // loop_footer_branch
      %14 = sbr.rel target = $region3
    $region8: #{tpu_custom_call.1} parent=1 // loop_exit
      _
    %810 = vsyncpa [#allocation4], 1
    %s811 = scalar_lea.sflag [#allocation4], 1
    %812 = vsyncpa %s811, 1
    %813 = vsyncpa [#allocation7], 1
    %814 = vsyncpa [#allocation5], 1
    %s815 = scalar_lea.sflag [#allocation5], 1
    %816 = vsyncpa %s815, 1

</llo_original>
